<compile_context>
chip_gen: v5e
topology: v5e:2x2
jax: 0.10.0
libtpu: 0.0.40
codegen_flags: <defaults>
</compile_context>

<pallas_src>
import jax
import jax.numpy as jnp
from jax.experimental import pallas as pl
from jax.experimental.pallas import tpu as pltpu


def _round_up(x, m):
    return (x + m - 1) // m * m


def _vmem_budget_bytes():
    """Per-generation VMEM budget with headroom (v7x ~48 MiB, v5e/v6e ~96 MiB)."""
    cap = 64 * 1024 * 1024
    try:
        info = pltpu.get_tpu_info()
        cap = int(getattr(info, "vmem_capacity_bytes", cap) or cap)
    except Exception:
        pass
    return (cap * 3) // 4


# ---------------------------------------------------------------------------
# Kernels
# ---------------------------------------------------------------------------
def _make_preprojected_kernel(h_resident, tile_k):
    """out[i] = sum_k A[i,k] @ H[k]  (H = X @ W precomputed).

    Accumulates directly into the f32 output block (its block index (i, 0)
    persists across the 'arbitrary' k axis), so no VMEM scratch is needed.
    """

    def kernel(a_ref, h_ref, o_ref):
        k = pl.program_id(1)

        @pl.when(k == 0)
        def _():
            o_ref[...] = jnp.zeros_like(o_ref)

        if h_resident:
            start = pl.multiple_of(k * tile_k, tile_k)
            h_tile = h_ref[pl.ds(start, tile_k), :]
        else:
            h_tile = h_ref[...]

        o_ref[...] += jnp.dot(a_ref[...], h_tile,
                              preferred_element_type=jnp.float32)

    return kernel


def _make_project_after_kernel(h_resident, tile_k):
    """acc[i] += A[i,k] @ X[k]; at the last k: out[i] = (acc.bf16) @ W."""

    def kernel(a_ref, x_ref, w_ref, o_ref, acc_ref):
        k = pl.program_id(1)

        @pl.when(k == 0)
        def _():
            acc_ref[...] = jnp.zeros_like(acc_ref)

        if h_resident:
            start = pl.multiple_of(k * tile_k, tile_k)
            x_tile = x_ref[pl.ds(start, tile_k), :]
        else:
            x_tile = x_ref[...]

        acc_ref[...] += jnp.dot(a_ref[...], x_tile,
                                preferred_element_type=jnp.float32)

        @pl.when(k == pl.num_programs(1) - 1)
        def _():
            # bf16 epilogue matmul (f32 x f32 would be emulated, 3-6x slower);
            # precision is already bf16-limited by the streamed A/X.
            o_ref[...] = jnp.dot(acc_ref[...].astype(w_ref.dtype), w_ref[...],
                                 preferred_element_type=jnp.float32
                                 ).astype(o_ref.dtype)

    return kernel


# ---------------------------------------------------------------------------
# Tiling / padding plan
# ---------------------------------------------------------------------------
def _plan(num_nodes, c_in, c_out, stream_dtype, force_h_streamed=False):
    sd = jnp.dtype(stream_dtype).itemsize
    c_in_pad = _round_up(c_in, 128)
    c_out_pad = _round_up(c_out, 128)
    # Decide the matmul association on padded widths; prefer streaming X@W on
    # ties (drops the epilogue matmul and the resident W for identical traffic).
    project_after = c_in_pad < c_out_pad
    c_mid_pad = c_in_pad if project_after else c_out_pad

    n128 = _round_up(num_nodes, 128)
    budget = _vmem_budget_bytes()
    # >= 2 row tiles whenever N allows so v7x's two TensorCores both get work.
    tile_m = 256 if n128 >= 512 else 128

    def vmem_use(tile_k, n_pad, h_resident):
        a_b = 2 * tile_m * tile_k * sd                       # double-buffered A
        h_b = (2 * n_pad * c_mid_pad * sd if h_resident
               else 2 * tile_k * c_mid_pad * sd)
        o_b = 2 * tile_m * c_out_pad * 4                     # f32 output block
        w_b = 2 * c_in_pad * c_out_pad * sd if project_after else 0
        acc_b = tile_m * c_mid_pad * 4 if project_after else 0
        return a_b + h_b + o_b + w_b + acc_b

    chosen = None
    for tile_k in (2048, 1024, 512, 256, 128):
        if tile_k > n128:
            continue
        n_pad = _round_up(n128, max(tile_m, tile_k))
        if n_pad - n128 > n128 // 4:        # cap padding-induced extra A traffic
            continue
        for h_resident in ((False,) if force_h_streamed else (True, False)):
            use = vmem_use(tile_k, n_pad, h_resident)
            if use <= budget:
                chosen = (tile_m, tile_k, n_pad, h_resident, use)
                break
        if chosen is not None:
            break
    if chosen is None:                       # conservative fallback
        tm, tk = 128, 128
        n_pad = n128
        chosen = (tm, tk, n_pad, False, vmem_use(tk, n_pad, False))

    tile_m, tile_k, n_pad, h_resident, use = chosen
    vmem_limit = int(min(budget, max(use + (4 << 20), 32 << 20)))
    return dict(
        tile_m=tile_m, tile_k=tile_k, n_pad=n_pad,
        c_in_pad=c_in_pad, c_out_pad=c_out_pad, c_mid_pad=c_mid_pad,
        project_after=project_after, h_resident=h_resident,
        vmem_limit=vmem_limit,
    )


# ---------------------------------------------------------------------------
# Wrapper
# ---------------------------------------------------------------------------
def gcn_layer_pallas(a_norm, x, w, *, num_nodes=None,
                     stream_dtype=jnp.bfloat16, plan=None,
                     force_h_streamed=False):
    """out = A_norm @ X @ W, streamed through a single tiled Pallas kernel."""
    n = int(num_nodes) if num_nodes is not None else int(x.shape[0])
    c_in, c_out = w.shape
    if plan is None:
        plan = _plan(n, c_in, c_out, stream_dtype, force_h_streamed)

    n_pad = plan["n_pad"]
    tile_m, tile_k = plan["tile_m"], plan["tile_k"]
    c_in_pad, c_out_pad = plan["c_in_pad"], plan["c_out_pad"]
    c_mid_pad = plan["c_mid_pad"]
    project_after = plan["project_after"]
    h_resident = plan["h_resident"]
    sd = jnp.dtype(stream_dtype).itemsize

    # A: only pad/cast if the caller did not already hand us the padded,
    # stream-dtype adjacency (gcn_forward builds it that way to avoid an extra
    # full pass over A on a purely A-bandwidth-bound kernel).
    if a_norm.shape == (n_pad, n_pad) and a_norm.dtype == jnp.dtype(stream_dtype):
        a_p = a_norm
    else:
        a_p = jnp.pad(a_norm.astype(stream_dtype),
                      ((0, n_pad - a_norm.shape[0]), (0, n_pad - a_norm.shape[1])))

    if project_after:
        h_p = jnp.pad(x.astype(stream_dtype),
                      ((0, n_pad - x.shape[0]), (0, c_in_pad - c_in)))
        w_p = jnp.pad(w.astype(stream_dtype),
                      ((0, c_in_pad - c_in), (0, c_out_pad - c_out)))
    else:
        h = jnp.dot(x, w, preferred_element_type=jnp.float32)      # tiny (N, C_out)
        h_p = jnp.pad(h.astype(stream_dtype),
                      ((0, n_pad - x.shape[0]), (0, c_out_pad - c_out)))

    grid = (n_pad // tile_m, n_pad // tile_k)

    a_spec = pl.BlockSpec((tile_m, tile_k), lambda i, k: (i, k))
    if h_resident:
        # Constant index_map: H loaded once and kept resident in VMEM.
        h_spec = pl.BlockSpec((n_pad, c_mid_pad), lambda i, k: (0, 0))
    else:
        h_spec = pl.BlockSpec((tile_k, c_mid_pad), lambda i, k: (k, 0))
    o_spec = pl.BlockSpec((tile_m, c_out_pad), lambda i, k: (i, 0))

    if project_after:
        kernel = _make_project_after_kernel(h_resident, tile_k)
        in_specs = [a_spec, h_spec,
                    pl.BlockSpec((c_in_pad, c_out_pad), lambda i, k: (0, 0))]
        operands = (a_p, h_p, w_p)
        scratch = [pltpu.VMEM((tile_m, c_mid_pad), jnp.float32)]
    else:
        kernel = _make_preprojected_kernel(h_resident, tile_k)
        in_specs = [a_spec, h_spec]
        operands = (a_p, h_p)
        scratch = []

    row_tiles = n_pad // tile_m
    flops = 2 * n_pad * n_pad * c_mid_pad
    if project_after:
        flops += 2 * n_pad * c_in_pad * c_out_pad
    h_passes = 1 if h_resident else row_tiles          # H re-streamed per row tile
    bytes_accessed = (n_pad * n_pad * sd
                      + h_passes * n_pad * c_mid_pad * sd
                      + (c_in_pad * c_out_pad * sd if project_after else 0)
                      + n_pad * c_out_pad * 4)

    out_p = pl.pallas_call(
        kernel,
        out_shape=jax.ShapeDtypeStruct((n_pad, c_out_pad), jnp.float32),
        grid_spec=pltpu.PrefetchScalarGridSpec(
            num_scalar_prefetch=0,
            grid=grid,
            in_specs=in_specs,
            out_specs=o_spec,
            scratch_shapes=scratch,
        ),
        compiler_params=pltpu.CompilerParams(
            dimension_semantics=("parallel", "arbitrary"),
            vmem_limit_bytes=plan["vmem_limit"],
        ),
        cost_estimate=pl.CostEstimate(
            flops=int(flops), transcendentals=0,
            bytes_accessed=int(bytes_accessed)),
    )(*operands)

    return out_p[:n, :c_out]


def build_normalized_adjacency(edge_index_with_loops, deg_inv_sqrt, num_nodes,
                               *, padded_size=None, dtype=jnp.float32):
    """Dense A_norm[i, j] = deg_inv_sqrt[i] * deg_inv_sqrt[j] for edge j -> i.

    Duplicate edges accumulate (matches the scatter-add spmm of the reference
    module).  Built directly at `padded_size` in `dtype` so the kernel never
    needs a separate pad+cast pass over A.
    """
    src = edge_index_with_loops[0]
    dst = edge_index_with_loops[1]
    vals = (deg_inv_sqrt[dst] * deg_inv_sqrt[src]).astype(jnp.float32)
    size = int(num_nodes) if padded_size is None else int(padded_size)
    a = jnp.zeros((size, size), dtype=jnp.float32)
    a = a.at[dst, src].add(vals)
    return a.astype(dtype)


def gcn_forward(x, edge_index_with_loops, deg_inv_sqrt, num_nodes, W,
                *, stream_dtype=jnp.bfloat16):
    plan = _plan(num_nodes, W.shape[0], W.shape[1], stream_dtype)
    a_p = build_normalized_adjacency(edge_index_with_loops, deg_inv_sqrt,
                                     num_nodes, padded_size=plan["n_pad"],
                                     dtype=stream_dtype)
    return gcn_layer_pallas(a_p, x, W, num_nodes=num_nodes,
                            stream_dtype=stream_dtype, plan=plan)


if __name__ == "__main__":
    key = jax.random.PRNGKey(0)
    k_w, k_x, k_src, k_dst, k_w2, k_w3 = jax.random.split(key, 6)

    num_nodes = 16
    in_channels = 8
    out_channels = 32
    num_rand_edges = 32

    # Deterministic parameter init (torch.randn(in, out) * 0.01 equivalent).
    W = jax.random.normal(k_w, (in_channels, out_channels), jnp.float32) * 0.01
    x = jax.random.normal(k_x, (num_nodes, in_channels), jnp.float32)

    # Random directed edges + self loops.
    src = jax.random.randint(k_src, (num_rand_edges,), 0, num_nodes)
    dst = jax.random.randint(k_dst, (num_rand_edges,), 0, num_nodes)
    loops = jnp.arange(num_nodes)
    edge_index_with_loops = jnp.stack(
        [jnp.concatenate([src, loops]), jnp.concatenate([dst, loops])], axis=0
    ).astype(jnp.int32)

    # deg_inv_sqrt from in-degree (including self loops).
    deg = jnp.zeros((num_nodes,), jnp.float32).at[edge_index_with_loops[1]].add(1.0)
    deg_inv_sqrt = jnp.where(deg > 0, 1.0 / jnp.sqrt(deg), 0.0)

    out = jax.block_until_ready(
        gcn_forward(x, edge_index_with_loops, deg_inv_sqrt, num_nodes, W))

    # Pure-JAX reference (tolerance accounts for bf16 streaming of A / X@W).
    a_norm = build_normalized_adjacency(edge_index_with_loops, deg_inv_sqrt, num_nodes)
    ref = (a_norm @ x) @ W
    assert out.shape == (num_nodes, out_channels)
    assert out.dtype == jnp.float32
    assert jnp.allclose(out, ref, atol=2e-3, rtol=2e-2), float(jnp.max(jnp.abs(out - ref)))

    # 2) C_out < C_in: padded widths tie -> still the preprojected association.
    W2 = jax.random.normal(k_w2, (out_channels, in_channels), jnp.float32) * 0.01
    x2 = jax.random.normal(k_x, (num_nodes, out_channels), jnp.float32)
    out2 = jax.block_until_ready(gcn_layer_pallas(a_norm, x2, W2, num_nodes=num_nodes))
    ref2 = a_norm @ (x2 @ W2)
    assert out2.shape == (num_nodes, in_channels)
    assert jnp.allclose(out2, ref2, atol=2e-3, rtol=2e-2), float(jnp.max(jnp.abs(out2 - ref2)))

    # 3) Padded C_out > padded C_in: exercises the project-after kernel
    #    (f32 accumulator scratch + bf16 epilogue acc @ W).
    wide = 256
    W3 = jax.random.normal(k_w3, (in_channels, wide), jnp.float32) * 0.01
    out3 = jax.block_until_ready(gcn_layer_pallas(a_norm, x, W3, num_nodes=num_nodes))
    ref3 = (a_norm @ x) @ W3
    assert out3.shape == (num_nodes, wide)
    assert jnp.allclose(out3, ref3, atol=2e-3, rtol=2e-2), float(jnp.max(jnp.abs(out3 - ref3)))

    # 4) Force the streamed-H (non-resident) pipeline path.
    out4 = jax.block_until_ready(
        gcn_layer_pallas(a_norm, x, W, num_nodes=num_nodes, force_h_streamed=True))
    assert jnp.allclose(out4, ref, atol=2e-3, rtol=2e-2), float(jnp.max(jnp.abs(out4 - ref)))

    print("KERNEL_OK")
</pallas_src>

<mosaic_0001>
module attributes {stable_mosaic.version = 11 : i64} {
  func.func @kernel(%arg0: i32, %arg1: i32, %arg2: memref<128x128xbf16, #tpu.memory_space<vmem>>, %arg3: memref<128x128xbf16, #tpu.memory_space<vmem>>, %arg4: memref<128x128xf32, #tpu.memory_space<vmem>>) attributes {dimension_semantics = [#tpu.dimension_semantics<parallel>, #tpu.dimension_semantics<arbitrary>], iteration_bounds = array<i64: 1, 1>, scalar_prefetch = 0 : i64, scratch_operands = 0 : i64, tpu.core_type = #tpu.core_type<tc>, window_params = [{transform_indices = @transform_0, window_bounds = array<i64: 128, 128>}, {pipeline_mode = #tpu.pipeline_mode<synchronous>, transform_indices = @transform_1, window_bounds = array<i64: 128, 128>}, {transform_indices = @transform_2, window_bounds = array<i64: 128, 128>}]} {
    %c0_i32 = arith.constant 0 : i32
    %0 = arith.cmpi eq, %arg1, %c0_i32 : i32
    %1 = arith.extui %0 : i1 to i32
    %c0_i32_0 = arith.constant 0 : i32
    %2 = arith.cmpi ne, %1, %c0_i32_0 : i32
    scf.if %2 {
      %cst_7 = arith.constant 0.000000e+00 : f32
      %12 = vector.broadcast %cst_7 : f32 to vector<128x128xf32>
      %c0_8 = arith.constant 0 : index
      %c0_9 = arith.constant 0 : index
      %13 = vector.load %arg4[%c0_8, %c0_9] : memref<128x128xf32, #tpu.memory_space<vmem>>, vector<128x128xf32>
      tpu.vector_store %arg4[%c0_8, %c0_9], %12 {strides = array<i32>} : memref<128x128xf32, #tpu.memory_space<vmem>>, vector<128x128xf32>,
    } else {
    }
    %c128_i32 = arith.constant 128 : i32
    %3 = arith.muli %arg1, %c128_i32 : i32
    %4 = tpu.assume_multiple %3, 128 : i32
    %5 = arith.index_cast %4 : i32 to index
    %c0 = arith.constant 0 : index
    %6 = vector.load %arg3[%5, %c0] : memref<128x128xbf16, #tpu.memory_space<vmem>>, vector<128x128xbf16>
    %c0_1 = arith.constant 0 : index
    %c0_2 = arith.constant 0 : index
    %7 = vector.load %arg4[%c0_1, %c0_2] : memref<128x128xf32, #tpu.memory_space<vmem>>, vector<128x128xf32>
    %c0_3 = arith.constant 0 : index
    %c0_4 = arith.constant 0 : index
    %8 = vector.load %arg2[%c0_3, %c0_4] : memref<128x128xbf16, #tpu.memory_space<vmem>>, vector<128x128xbf16>
    %cst = arith.constant dense<0.000000e+00> : vector<128x128xf32>
    %9 = tpu.matmul %8, %6, %cst {dimension_numbers = #tpu.dot_dimension_numbers<[1], [0], [0], [1], [0, 0, 1, 1], [], []>} : vector<128x128xbf16>, vector<128x128xbf16>, vector<128x128xf32> -> vector<128x128xf32>
    %10 = arith.addf %7, %9 : vector<128x128xf32>
    %c0_5 = arith.constant 0 : index
    %c0_6 = arith.constant 0 : index
    %11 = vector.load %arg4[%c0_5, %c0_6] : memref<128x128xf32, #tpu.memory_space<vmem>>, vector<128x128xf32>
    tpu.vector_store %arg4[%c0_5, %c0_6], %10 {strides = array<i32>} : memref<128x128xf32, #tpu.memory_space<vmem>>, vector<128x128xf32>,
    return
  }
  func.func @transform_0(%arg0: i32, %arg1: i32) -> (i32, i32) {
    %c0_i32 = arith.constant 0 : i32
    return %arg0, %arg1 : i32, i32
  }
  func.func @transform_1(%arg0: i32, %arg1: i32) -> (i32, i32) {
    %c0_i32 = arith.constant 0 : i32
    %c0_i32_0 = arith.constant 0 : i32
    %c0_i32_1 = arith.constant 0 : i32
    return %c0_i32, %c0_i32_0 : i32, i32
  }
  func.func @transform_2(%arg0: i32, %arg1: i32) -> (i32, i32) {
    %c0_i32 = arith.constant 0 : i32
    %c0_i32_0 = arith.constant 0 : i32
    return %arg0, %c0_i32 : i32, i32
  }
}

</mosaic_0001>

<llo_original>
// kernel: tpu_custom_call.1
$region0: #{tpu_custom_call.1}
  #allocation0 [shape = 'u32[]', space=smem, size = 0x4, offset = 0x4, fixed_abs, tag = 'smem constant byte address 0x4 - core index']
  #allocation1 [shape = 'u32[72,128]{1,0:T(1,128)}', space=vmem, size = 0x9000, scoped, tag = 'internal scratch']
  %s0 = inlined_call_operand.hbm [shape: bf16[128,128], index: 0, kind: input, shape index: {}]
  %s1 = inlined_call_operand.hbm [shape: bf16[128,128], index: 1, kind: input, shape index: {}]
  %s2 = inlined_call_operand.hbm [shape: f32[128,128], index: 2, kind: output, shape index: {}]
  %s3 = sld [smem:[#allocation0]]
  $region30: #{tpu_custom_call.1} parent=0
    _
  %s5 = ssub.s32 1, %s3
  %s6 = scalar_select 0, %s5, %s3
  $region1: #{tpu_custom_call.1} parent=0
    #allocation2 [shape = 'u8[32768]{0}', space=vmem, size = 0x8000, scoped, tag = 'input window, operand 0, single buffered']
    #allocation3 [shape = 's32[1]{0}', space=sflag, size = 0x4, scoped, tag = 'scoped memory for tpu_custom_call.1']
    #allocation4 [shape = 's32[1]{0}', space=sflag, size = 0x4, scoped, tag = 'scoped memory for tpu_custom_call.1']
    #allocation5 [shape = 'u8[32768]{0}', space=vmem, size = 0x8000, scoped, tag = 'input window, operand 1, single buffered']
    #allocation6 [shape = 's32[1]{0}', space=sflag, size = 0x4, scoped, tag = 'scoped memory for tpu_custom_call.1']
    #allocation7 [shape = 'u8[65536]{0}', space=vmem, size = 0x10000, scoped, tag = 'output window, operand 0, single buffered']
    %7 = vsyncpa [#allocation3], 0
    %8 = vsyncpa [#allocation6], 0
    %9 = vsyncpa [#allocation4], 0
    // Predicated region
    $region2: #{tpu_custom_call.1} parent=1 // pred_check
      _
    $region3: #{tpu_custom_call.1} parent=1 // pred_check_branch
      %11 = sbr.rel (0) target = $region5
    $region4: #{tpu_custom_call.1} parent=1 // pred_region
      %13 = vsyncadd [#allocation3], 0
      %s14 = sshll.u32 %s0, 4
      %s15 = int_to_ptr.hbm [resolvable:$true] %s14
      %s16 = sshll.u32 [#allocation2], 4
      %s17 = int_to_ptr.vmem [resolvable:$true] %s16
      %22 = dma.hbm_to_vmem [thread:$0]  %s15, 1024, %s17, [#allocation3], 64, 64, 4
    $region5: #{tpu_custom_call.1} parent=1 // pred_fallthru
      _
    // Predicated region
    $region6: #{tpu_custom_call.1} parent=1 // pred_check
      _
    $region7: #{tpu_custom_call.1} parent=1 // pred_check_branch
      %24 = sbr.rel (0) target = $region9
    $region8: #{tpu_custom_call.1} parent=1 // pred_region
      %26 = vsyncadd [#allocation6], 0
      %s27 = sshll.u32 %s1, 4
      %s28 = int_to_ptr.hbm [resolvable:$true] %s27
      %s29 = sshll.u32 [#allocation5], 4
      %s30 = int_to_ptr.vmem [resolvable:$true] %s29
      %35 = dma.hbm_to_vmem [thread:$0]  %s28, 1024, %s30, [#allocation6], 64, 64, 4
    $region9: #{tpu_custom_call.1} parent=1 // pred_fallthru
      _
    // Predicated region
    $region10: #{tpu_custom_call.1} parent=1 // pred_check
      _
    $region11: #{tpu_custom_call.1} parent=1 // pred_check_branch
      %37 = sbr.rel (0) target = $region13
    $region12: #{tpu_custom_call.1} parent=1 // pred_region
      %39 = dma.done [#allocation3], 1024
    $region13: #{tpu_custom_call.1} parent=1 // pred_fallthru
      _
    // Predicated region
    $region14: #{tpu_custom_call.1} parent=1 // pred_check
      _
    $region15: #{tpu_custom_call.1} parent=1 // pred_check_branch
      %41 = sbr.rel (0) target = $region17
    $region16: #{tpu_custom_call.1} parent=1 // pred_region
      %43 = dma.done [#allocation6], 1024
    $region17: #{tpu_custom_call.1} parent=1 // pred_fallthru
      _
    %p44 = scmp.eq.s32.totalorder 0, 0
    // Predicated region
    $region18: #{tpu_custom_call.1} parent=1 // pred_check
      %p45 = pneg %p44
    $region19: #{tpu_custom_call.1} parent=1 // pred_check_branch
      %47 = sbr.rel (%p45) target = $region21
    $region20: #{tpu_custom_call.1} parent=1 // pred_region
      %48 = vst [vmem:[#allocation7] sm:$0xff] 0.0
      %49 = vst [vmem:[#allocation7 + $0x8] sm:$0xff] 0.0
      %50 = vst [vmem:[#allocation7 + $0x10] sm:$0xff] 0.0
      %51 = vst [vmem:[#allocation7 + $0x18] sm:$0xff] 0.0
      %52 = vst [vmem:[#allocation7 + $0x20] sm:$0xff] 0.0
      %53 = vst [vmem:[#allocation7 + $0x28] sm:$0xff] 0.0
      %54 = vst [vmem:[#allocation7 + $0x30] sm:$0xff] 0.0
      %55 = vst [vmem:[#allocation7 + $0x38] sm:$0xff] 0.0
      %56 = vst [vmem:[#allocation7 + $0x40] sm:$0xff] 0.0
      %57 = vst [vmem:[#allocation7 + $0x48] sm:$0xff] 0.0
      %58 = vst [vmem:[#allocation7 + $0x50] sm:$0xff] 0.0
      %59 = vst [vmem:[#allocation7 + $0x58] sm:$0xff] 0.0
      %60 = vst [vmem:[#allocation7 + $0x60] sm:$0xff] 0.0
      %61 = vst [vmem:[#allocation7 + $0x68] sm:$0xff] 0.0
      %62 = vst [vmem:[#allocation7 + $0x70] sm:$0xff] 0.0
      %63 = vst [vmem:[#allocation7 + $0x78] sm:$0xff] 0.0
    $region21: #{tpu_custom_call.1} parent=1 // pred_fallthru
      _
    %s64 = smul.u32 0, 128
    %s65 = sshra.s32 %s64, 3
    %s66 = sand.u32 %s64, 7
    %s67 = smul.addr %s65, 4
    %s68 = scalar_lea.vmem [#allocation5], %s67
    %v69 = vld [vmem:[%s68] sm:$0xf]
    %v70 = vld [vmem:[%s68 + $0x4] sm:$0xf]
    %v71 = vld [vmem:[%s68 + $0x8] sm:$0xf]
    %v72 = vld [vmem:[%s68 + $0xc] sm:$0xf]
    %v73 = vld [vmem:[%s68 + $0x10] sm:$0xf]
    %v74 = vld [vmem:[%s68 + $0x14] sm:$0xf]
    %v75 = vld [vmem:[%s68 + $0x18] sm:$0xf]
    %v76 = vld [vmem:[%s68 + $0x1c] sm:$0xf]
    %v77 = vld [vmem:[%s68 + $0x20] sm:$0xf]
    %v78 = vld [vmem:[%s68 + $0x24] sm:$0xf]
    %v79 = vld [vmem:[%s68 + $0x28] sm:$0xf]
    %v80 = vld [vmem:[%s68 + $0x2c] sm:$0xf]
    %v81 = vld [vmem:[%s68 + $0x30] sm:$0xf]
    %v82 = vld [vmem:[%s68 + $0x34] sm:$0xf]
    %v83 = vld [vmem:[%s68 + $0x38] sm:$0xf]
    %v84 = vld [vmem:[%s68 + $0x3c] sm:$0xf]
    %v85 = vld [vmem:[#allocation7] sm:$0xff]
    %v86 = vld [vmem:[#allocation7 + $0x8] sm:$0xff]
    %v87 = vld [vmem:[#allocation7 + $0x10] sm:$0xff]
    %v88 = vld [vmem:[#allocation7 + $0x18] sm:$0xff]
    %v89 = vld [vmem:[#allocation7 + $0x20] sm:$0xff]
    %v90 = vld [vmem:[#allocation7 + $0x28] sm:$0xff]
    %v91 = vld [vmem:[#allocation7 + $0x30] sm:$0xff]
    %v92 = vld [vmem:[#allocation7 + $0x38] sm:$0xff]
    %v93 = vld [vmem:[#allocation7 + $0x40] sm:$0xff]
    %v94 = vld [vmem:[#allocation7 + $0x48] sm:$0xff]
    %v95 = vld [vmem:[#allocation7 + $0x50] sm:$0xff]
    %v96 = vld [vmem:[#allocation7 + $0x58] sm:$0xff]
    %v97 = vld [vmem:[#allocation7 + $0x60] sm:$0xff]
    %v98 = vld [vmem:[#allocation7 + $0x68] sm:$0xff]
    %v99 = vld [vmem:[#allocation7 + $0x70] sm:$0xff]
    %v100 = vld [vmem:[#allocation7 + $0x78] sm:$0xff]
    %v101 = vld [vmem:[#allocation2] sm:$0xf]
    %v102 = vld [vmem:[#allocation2 + $0x4] sm:$0xf]
    %v103 = vld [vmem:[#allocation2 + $0x8] sm:$0xf]
    %v104 = vld [vmem:[#allocation2 + $0xc] sm:$0xf]
    %v105 = vld [vmem:[#allocation2 + $0x10] sm:$0xf]
    %v106 = vld [vmem:[#allocation2 + $0x14] sm:$0xf]
    %v107 = vld [vmem:[#allocation2 + $0x18] sm:$0xf]
    %v108 = vld [vmem:[#allocation2 + $0x1c] sm:$0xf]
    %v109 = vld [vmem:[#allocation2 + $0x20] sm:$0xf]
    %v110 = vld [vmem:[#allocation2 + $0x24] sm:$0xf]
    %v111 = vld [vmem:[#allocation2 + $0x28] sm:$0xf]
    %v112 = vld [vmem:[#allocation2 + $0x2c] sm:$0xf]
    %v113 = vld [vmem:[#allocation2 + $0x30] sm:$0xf]
    %v114 = vld [vmem:[#allocation2 + $0x34] sm:$0xf]
    %v115 = vld [vmem:[#allocation2 + $0x38] sm:$0xf]
    %v116 = vld [vmem:[#allocation2 + $0x3c] sm:$0xf]
    %v133 = vunpack.c.l.b16 %v101
    %v134 = vunpack.c.l.b16 %v102
    %v135 = vunpack.c.l.b16 %v103
    %v136 = vunpack.c.l.b16 %v104
    %v137 = vunpack.c.l.b16 %v105
    %v138 = vunpack.c.l.b16 %v106
    %v139 = vunpack.c.l.b16 %v107
    %v140 = vunpack.c.l.b16 %v108
    %v141 = vunpack.c.l.b16 %v109
    %v142 = vunpack.c.l.b16 %v110
    %v143 = vunpack.c.l.b16 %v111
    %v144 = vunpack.c.l.b16 %v112
    %v145 = vunpack.c.l.b16 %v113
    %v146 = vunpack.c.l.b16 %v114
    %v147 = vunpack.c.l.b16 %v115
    %v148 = vunpack.c.l.b16 %v116
    %v149 = vpack.c.b16 %v134, %v133
    %v150 = vpack.c.b16 %v136, %v135
    %v151 = vpack.c.b16 %v138, %v137
    %v152 = vpack.c.b16 %v140, %v139
    %v153 = vpack.c.b16 %v142, %v141
    %v154 = vpack.c.b16 %v144, %v143
    %v155 = vpack.c.b16 %v146, %v145
    %v156 = vpack.c.b16 %v148, %v147
    %v181 = vunpack.c.l.b16 %v69
    %v182 = vunpack.c.l.b16 %v70
    %v183 = vunpack.c.l.b16 %v71
    %v184 = vunpack.c.l.b16 %v72
    %v185 = vunpack.c.l.b16 %v73
    %v186 = vunpack.c.l.b16 %v74
    %v187 = vunpack.c.l.b16 %v75
    %v188 = vunpack.c.l.b16 %v76
    %v189 = vunpack.c.l.b16 %v77
    %v190 = vunpack.c.l.b16 %v78
    %v191 = vunpack.c.l.b16 %v79
    %v192 = vunpack.c.l.b16 %v80
    %v193 = vunpack.c.l.b16 %v81
    %v194 = vunpack.c.l.b16 %v82
    %v195 = vunpack.c.l.b16 %v83
    %v196 = vunpack.c.l.b16 %v84
    %v197 = vpack.c.b16 %v182, %v181
    %v198 = vpack.c.b16 %v184, %v183
    %v199 = vpack.c.b16 %v186, %v185
    %v200 = vpack.c.b16 %v188, %v187
    %v201 = vpack.c.b16 %v190, %v189
    %v202 = vpack.c.b16 %v192, %v191
    %v203 = vpack.c.b16 %v194, %v193
    %v204 = vpack.c.b16 %v196, %v195
    %213 = vmatpush.bf16.msra.mxu0 %v204
    %214 = vmatpush.bf16.msra.mxu0 %v203
    %215 = vmatpush.bf16.msra.mxu0 %v202
    %216 = vmatpush.bf16.msra.mxu0 %v201
    %217 = vmatpush.bf16.msra.mxu0 %v200
    %218 = vmatpush.bf16.msra.mxu0 %v199
    %219 = vmatpush.bf16.msra.mxu0 %v198
    %220 = vmatpush.bf16.msra.mxu0 %v197
    %221 = vmatmul.bf16.gmra.mxu0 %v149
    %v222 = vpop.f32.mrf.mxu0
    %v223 = vadd.f32 0.0, %v222
    %v224 = vpop.f32.mrf.mxu0
    %v225 = vadd.f32 0.0, %v224
    %226 = vmatmul.bf16.gmra.mxu0 %v150
    %v227 = vpop.f32.mrf.mxu0
    %v228 = vadd.f32 0.0, %v227
    %v229 = vpop.f32.mrf.mxu0
    %v230 = vadd.f32 0.0, %v229
    %231 = vmatmul.bf16.gmra.mxu0 %v151
    %v232 = vpop.f32.mrf.mxu0
    %v233 = vadd.f32 0.0, %v232
    %v234 = vpop.f32.mrf.mxu0
    %v235 = vadd.f32 0.0, %v234
    %236 = vmatmul.bf16.gmra.mxu0 %v152
    %v237 = vpop.f32.mrf.mxu0
    %v238 = vadd.f32 0.0, %v237
    %v239 = vpop.f32.mrf.mxu0
    %v240 = vadd.f32 0.0, %v239
    %241 = vmatmul.bf16.gmra.mxu0 %v153
    %v242 = vpop.f32.mrf.mxu0
    %v243 = vadd.f32 0.0, %v242
    %v244 = vpop.f32.mrf.mxu0
    %v245 = vadd.f32 0.0, %v244
    %246 = vmatmul.bf16.gmra.mxu0 %v154
    %v247 = vpop.f32.mrf.mxu0
    %v248 = vadd.f32 0.0, %v247
    %v249 = vpop.f32.mrf.mxu0
    %v250 = vadd.f32 0.0, %v249
    %251 = vmatmul.bf16.gmra.mxu0 %v155
    %v252 = vpop.f32.mrf.mxu0
    %v253 = vadd.f32 0.0, %v252
    %v254 = vpop.f32.mrf.mxu0
    %v255 = vadd.f32 0.0, %v254
    %256 = vmatmul.bf16.gmra.mxu0 %v156
    %v257 = vpop.f32.mrf.mxu0
    %v258 = vadd.f32 0.0, %v257
    %v259 = vpop.f32.mrf.mxu0
    %v260 = vadd.f32 0.0, %v259
    %261 = vdwg.mxu0
    %v262 = vadd.f32 %v85, %v223
    %v263 = vadd.f32 %v86, %v225
    %v264 = vadd.f32 %v87, %v228
    %v265 = vadd.f32 %v88, %v230
    %v266 = vadd.f32 %v89, %v233
    %v267 = vadd.f32 %v90, %v235
    %v268 = vadd.f32 %v91, %v238
    %v269 = vadd.f32 %v92, %v240
    %v270 = vadd.f32 %v93, %v243
    %v271 = vadd.f32 %v94, %v245
    %v272 = vadd.f32 %v95, %v248
    %v273 = vadd.f32 %v96, %v250
    %v274 = vadd.f32 %v97, %v253
    %v275 = vadd.f32 %v98, %v255
    %v276 = vadd.f32 %v99, %v258
    %v277 = vadd.f32 %v100, %v260
    %278 = vst [vmem:[#allocation7] sm:$0xff] %v262
    %279 = vst [vmem:[#allocation7 + $0x8] sm:$0xff] %v263
    %280 = vst [vmem:[#allocation7 + $0x10] sm:$0xff] %v264
    %281 = vst [vmem:[#allocation7 + $0x18] sm:$0xff] %v265
    %282 = vst [vmem:[#allocation7 + $0x20] sm:$0xff] %v266
    %283 = vst [vmem:[#allocation7 + $0x28] sm:$0xff] %v267
    %284 = vst [vmem:[#allocation7 + $0x30] sm:$0xff] %v268
    %285 = vst [vmem:[#allocation7 + $0x38] sm:$0xff] %v269
    %286 = vst [vmem:[#allocation7 + $0x40] sm:$0xff] %v270
    %287 = vst [vmem:[#allocation7 + $0x48] sm:$0xff] %v271
    %288 = vst [vmem:[#allocation7 + $0x50] sm:$0xff] %v272
    %289 = vst [vmem:[#allocation7 + $0x58] sm:$0xff] %v273
    %290 = vst [vmem:[#allocation7 + $0x60] sm:$0xff] %v274
    %291 = vst [vmem:[#allocation7 + $0x68] sm:$0xff] %v275
    %292 = vst [vmem:[#allocation7 + $0x70] sm:$0xff] %v276
    %293 = vst [vmem:[#allocation7 + $0x78] sm:$0xff] %v277
    // Predicated region
    $region22: #{tpu_custom_call.1} parent=1 // pred_check
      _
    $region23: #{tpu_custom_call.1} parent=1 // pred_check_branch
      %295 = sbr.rel (0) target = $region25
    $region24: #{tpu_custom_call.1} parent=1 // pred_region
      %297 = vsyncadd [#allocation4], 0
      %s298 = sshll.u32 [#allocation7], 4
      %s299 = int_to_ptr.vmem [resolvable:$true] %s298
      %s300 = sshll.u32 %s2, 4
      %s301 = int_to_ptr.hbm [resolvable:$true] %s300
      %306 = dma.vmem_to_hbm [thread:$0]  %s299, 2048, %s301, [#allocation4], 128, 128, 8
    $region25: #{tpu_custom_call.1} parent=1 // pred_fallthru
      _
    // Predicated region
    $region26: #{tpu_custom_call.1} parent=1 // pred_check
      _
    $region27: #{tpu_custom_call.1} parent=1 // pred_check_branch
      %308 = sbr.rel (0) target = $region29
    $region28: #{tpu_custom_call.1} parent=1 // pred_region
      %310 = dma.done [#allocation4], 2048
    $region29: #{tpu_custom_call.1} parent=1 // pred_fallthru
      _
    %311 = vsyncpa [#allocation3], 1
    %312 = vsyncpa [#allocation6], 1
    %313 = vsyncpa [#allocation4], 1

</llo_original>
